<compile_context>
chip_gen: v7x
topology: tpu7x:2x2x1
jax: 0.10.0
libtpu: 0.0.40
codegen_flags: <defaults>
</compile_context>

<pallas_src>
import jax
import jax.numpy as jnp
from jax import lax
from jax.experimental import pallas as pl
from jax.experimental.pallas import tpu as pltpu

_EPS = 1e-5  # PyTorch BatchNorm2d default eps


# --------------------------------------------------------------------------
# Kernel
# --------------------------------------------------------------------------
def basic_block_kernel(x_ref, wm_ref, w2_ref, t_ref, o_ref):
    # x_ref : (NB, F_in)       bf16 flattened NHWC images (F_in = H*W*Cin)
    # wm_ref: (F_in, F2 + F1)  bf16 merged [Sb | W1b]  (BN1 scale folded into W1b)
    #                          cols [0:F2]   = option-'A' shortcut
    #                          cols [F2:... ] = unrolled conv1
    # w2_ref: (F1, F2)         bf16 unrolled conv2 (BN2 scale folded)
    # t_ref : (2, F1)          fp32; row 0 = bn1 shift tiled (F1),
    #                                row 1[:F2] = bn2 shift tiled
    # o_ref : (NB, F2)         fp32
    f2 = w2_ref.shape[1]

    x = x_ref[...]                                     # (NB, F_in) bf16
    t = t_ref[...]                                     # (2, F1)    fp32

    # One merged matmul: shortcut (first F2 cols, 128-aligned) + conv1.
    m = jnp.dot(x, wm_ref[...], preferred_element_type=jnp.float32)  # (NB, F2+F1)
    shortcut = m[:, :f2]                               # (NB, F2)
    h1 = jnp.maximum(m[:, f2:] + t[0], 0.0)            # conv1 + bn1 shift + relu

    # conv2 + bn2 shift + residual add + relu.
    out = jnp.dot(h1.astype(w2_ref.dtype), w2_ref[...],
                  preferred_element_type=jnp.float32)  # (NB, F2)
    out = jnp.maximum(out + shortcut + t[1, :f2], 0.0)

    o_ref[...] = out.astype(o_ref.dtype)


# --------------------------------------------------------------------------
# Wrapper
# --------------------------------------------------------------------------
def basic_block(x_nchw, prepped):
    """BasicBlock forward (stride=1, option='A'). Input/output are NCHW."""
    Wm, W2b, tb = prepped
    N, Cin, H, W = x_nchw.shape
    H2, W2 = H - 4, W - 4
    f_in = H * W * Cin
    f1, f2 = W2b.shape
    Cmid = f2 // (H2 * W2)

    # residual add / channel pad must be shape-consistent (see header note)
    assert Wm.shape == (f_in, f2 + f1)
    assert (H + 1) // 2 == H2 and (W + 1) // 2 == W2
    assert Cin + 2 * (Cmid // 4) == Cmid

    # NCHW -> NHWC, flatten each image into one lane-dense row, cast to bf16
    # (MXU operands; accumulation stays fp32 inside the kernel).
    x_flat = jnp.transpose(x_nchw, (0, 2, 3, 1)).astype(jnp.bfloat16)
    x_flat = x_flat.reshape(N, f_in)

    # Batch tiling: the whole batch is the matmul M dim.  Only split into
    # blocks of 256 rows (multiple of 8 sublanes, fills the v6e/v7x MXU rows)
    # when N is large enough to amortize the per-grid-step overhead and make
    # the v7x dual-TC split worthwhile.  At N=2 this is a single grid step.
    if N >= 256 and N % 256 == 0:
        nb = 256
    else:
        nb = N
    n_blocks = N // nb

    # Constant weights are revisited with the same (0, 0) block every step;
    # when there is more than one step, double-buffering them is pure VMEM
    # waste, so request a single buffer.
    w_pipe = {} if n_blocks == 1 else {"pipeline_mode": pl.Buffered(1)}

    out = pl.pallas_call(
        basic_block_kernel,
        out_shape=jax.ShapeDtypeStruct((N, f2), jnp.float32),
        grid_spec=pltpu.PrefetchScalarGridSpec(
            num_scalar_prefetch=0,
            grid=(n_blocks,),
            in_specs=[
                pl.BlockSpec((nb, f_in), lambda i: (i, 0)),
                pl.BlockSpec(Wm.shape, lambda i: (0, 0), **w_pipe),
                pl.BlockSpec(W2b.shape, lambda i: (0, 0), **w_pipe),
                pl.BlockSpec(tb.shape, lambda i: (0, 0), **w_pipe),
            ],
            out_specs=pl.BlockSpec((nb, f2), lambda i: (i, 0)),
        ),
        compiler_params=pltpu.CompilerParams(
            dimension_semantics=("parallel",)),
    )(x_flat, Wm, W2b, tb)

    out = out.reshape(N, H2, W2, Cmid)
    return jnp.transpose(out, (0, 3, 1, 2))


# --------------------------------------------------------------------------
# One-time parameter preparation (BN fusion + conv unrolling + merge + bf16)
# --------------------------------------------------------------------------
def init_params(key, in_planes, planes):
    """Deterministic synthetic parameters (conv weights/bias + BN stats)."""
    ks = jax.random.split(key, 12)
    return {
        "w1": 0.2 * jax.random.normal(ks[0], (3, 3, in_planes, planes), jnp.float32),
        "b1": 0.1 * jax.random.normal(ks[1], (planes,), jnp.float32),
        "g1": 1.0 + 0.1 * jax.random.normal(ks[2], (planes,), jnp.float32),
        "be1": 0.1 * jax.random.normal(ks[3], (planes,), jnp.float32),
        "m1": 0.1 * jax.random.normal(ks[4], (planes,), jnp.float32),
        "v1": jax.random.uniform(ks[5], (planes,), jnp.float32, 0.5, 1.5),
        "w2": 0.2 * jax.random.normal(ks[6], (3, 3, planes, planes), jnp.float32),
        "b2": 0.1 * jax.random.normal(ks[7], (planes,), jnp.float32),
        "g2": 1.0 + 0.1 * jax.random.normal(ks[8], (planes,), jnp.float32),
        "be2": 0.1 * jax.random.normal(ks[9], (planes,), jnp.float32),
        "m2": 0.1 * jax.random.normal(ks[10], (planes,), jnp.float32),
        "v2": jax.random.uniform(ks[11], (planes,), jnp.float32, 0.5, 1.5),
    }


def prepare_params(p, H, W):
    """Fold conv bias + eval-mode BN into the conv weights, unroll each 3x3
    VALID conv (and the option-'A' shortcut) into an equivalent dense matrix
    on the flattened NHWC image, merge [Sb | W1b], and cast weights to bf16.
    Pure one-time parameter transform (outside the kernel)."""
    in_planes, planes = p["w1"].shape[2], p["w1"].shape[3]

    s1 = p["g1"] / jnp.sqrt(p["v1"] + _EPS)
    t1 = p["be1"] + (p["b1"] - p["m1"]) * s1
    s2 = p["g2"] / jnp.sqrt(p["v2"] + _EPS)
    t2 = p["be2"] + (p["b2"] - p["m2"]) * s2
    w1s = p["w1"] * s1[None, None, None, :]
    w2s = p["w2"] * s2[None, None, None, :]

    H1, W1 = H - 2, W - 2
    H2, W2 = H1 - 2, W1 - 2
    dn = ("NHWC", "HWIO", "NHWC")

    def conv_as_matrix(w, h, wd, cin):
        basis = jnp.eye(h * wd * cin, dtype=jnp.float32).reshape(-1, h, wd, cin)
        out = lax.conv_general_dilated(basis, w, (1, 1), "VALID",
                                       dimension_numbers=dn,
                                       precision=lax.Precision.HIGHEST)
        return out.reshape(h * wd * cin, -1)

    W1b = conv_as_matrix(w1s, H, W, in_planes)     # (H*W*Cin,     H1*W1*Cmid)
    W2b = conv_as_matrix(w2s, H1, W1, planes)      # (H1*W1*Cmid,  H2*W2*Cmid)

    # option-'A' shortcut: ::2 spatial subsample + symmetric channel zero-pad,
    # unrolled the same way (0/1 placement matrix, exactly representable in bf16).
    pad = planes // 4
    basis = jnp.eye(H * W * in_planes, dtype=jnp.float32).reshape(-1, H, W, in_planes)
    sc = basis[:, ::2, ::2, :]
    sc = jnp.pad(sc, ((0, 0), (0, 0), (0, 0), (pad, pad)))
    Sb = sc.reshape(H * W * in_planes, -1)         # (H*W*Cin, H2*W2*Cmid)

    f1, f2 = H1 * W1 * planes, H2 * W2 * planes

    # Merge shortcut and conv1 into one matmul operand.  Sb FIRST so the
    # column split points (0, f2, f2+f1) are 128-lane aligned (f2 = 128 here).
    Wm = jnp.concatenate([Sb, W1b], axis=1).astype(jnp.bfloat16)   # (F_in, F2+F1)
    W2b = W2b.astype(jnp.bfloat16)

    tb = jnp.zeros((2, f1), jnp.float32)
    tb = tb.at[0].set(jnp.tile(t1, H1 * W1))
    tb = tb.at[1, :f2].set(jnp.tile(t2, H2 * W2))
    return (Wm, W2b, tb)


# --------------------------------------------------------------------------
# Pure-JAX reference of the PyTorch forward (eval-mode BN, fp32 HIGHEST)
# --------------------------------------------------------------------------
def reference(x_nchw, p):
    x = jnp.transpose(x_nchw, (0, 2, 3, 1)).astype(jnp.float32)
    dn = ("NHWC", "HWIO", "NHWC")
    y = lax.conv_general_dilated(x, p["w1"], (1, 1), "VALID", dimension_numbers=dn,
                                 precision=lax.Precision.HIGHEST) + p["b1"]
    y = (y - p["m1"]) / jnp.sqrt(p["v1"] + _EPS) * p["g1"] + p["be1"]
    y = jnp.maximum(y, 0.0)
    y = lax.conv_general_dilated(y, p["w2"], (1, 1), "VALID", dimension_numbers=dn,
                                 precision=lax.Precision.HIGHEST) + p["b2"]
    y = (y - p["m2"]) / jnp.sqrt(p["v2"] + _EPS) * p["g2"] + p["be2"]
    planes = p["w1"].shape[-1]
    sc = x[:, ::2, ::2, :]
    sc = jnp.pad(sc, ((0, 0), (0, 0), (0, 0), (planes // 4, planes // 4)))
    y = jnp.maximum(y + sc, 0.0)
    return jnp.transpose(y, (0, 3, 1, 2))


if __name__ == "__main__":
    # BasicBlock(in_planes=4, planes=8, stride=1, option='A'), x: (2, 4, 8, 8)
    # (H = W = 8 is what the padding=0 convs + option-'A' shortcut imply.)
    N, in_planes, planes, H, W = 2, 4, 8, 8, 8

    key = jax.random.PRNGKey(0)
    kx, kp = jax.random.split(key)
    x = jax.random.normal(kx, (N, in_planes, H, W), jnp.float32)

    raw = init_params(kp, in_planes, planes)
    prepped = prepare_params(raw, H, W)

    out = basic_block(x, prepped)
    out = jax.block_until_ready(out)

    ref = reference(x, raw)
    assert out.shape == (N, planes, H - 4, W - 4), out.shape
    # Tolerance covers the intentional bf16 MXU operands (fp32 accumulation)
    # vs. the fp32 HIGHEST-precision reference.
    assert jnp.allclose(out, ref, atol=5e-2, rtol=5e-2), float(
        jnp.max(jnp.abs(out - ref)))

    print("KERNEL_OK")
</pallas_src>

<mosaic_0001>
module attributes {stable_mosaic.version = 11 : i64} {
  func.func @basic_block_kernel(%arg0: i32, %arg1: memref<2x256xbf16, #tpu.memory_space<vmem>>, %arg2: memref<256x416xbf16, #tpu.memory_space<vmem>>, %arg3: memref<288x128xbf16, #tpu.memory_space<vmem>>, %arg4: memref<2x288xf32, #tpu.memory_space<vmem>>, %arg5: memref<2x128xf32, #tpu.memory_space<vmem>>) attributes {dimension_semantics = [#tpu.dimension_semantics<parallel>], iteration_bounds = array<i64: 1>, scalar_prefetch = 0 : i64, scratch_operands = 0 : i64, tpu.core_type = #tpu.core_type<tc>, window_params = [{transform_indices = @transform_0, window_bounds = array<i64: 2, 256>}, {pipeline_mode = #tpu.pipeline_mode<synchronous>, transform_indices = @transform_1, window_bounds = array<i64: 256, 416>}, {pipeline_mode = #tpu.pipeline_mode<synchronous>, transform_indices = @transform_2, window_bounds = array<i64: 288, 128>}, {pipeline_mode = #tpu.pipeline_mode<synchronous>, transform_indices = @transform_3, window_bounds = array<i64: 2, 288>}, {transform_indices = @transform_4, window_bounds = array<i64: 2, 128>}]} {
    %c0 = arith.constant 0 : index
    %c0_0 = arith.constant 0 : index
    %0 = vector.load %arg1[%c0, %c0_0] : memref<2x256xbf16, #tpu.memory_space<vmem>>, vector<2x256xbf16>
    %c0_1 = arith.constant 0 : index
    %c0_2 = arith.constant 0 : index
    %1 = vector.load %arg4[%c0_1, %c0_2] : memref<2x288xf32, #tpu.memory_space<vmem>>, vector<2x288xf32>
    %c0_3 = arith.constant 0 : index
    %c0_4 = arith.constant 0 : index
    %2 = vector.load %arg2[%c0_3, %c0_4] : memref<256x416xbf16, #tpu.memory_space<vmem>>, vector<256x416xbf16>
    %cst = arith.constant dense<0.000000e+00> : vector<2x416xf32>
    %3 = tpu.matmul %0, %2, %cst {dimension_numbers = #tpu.dot_dimension_numbers<[1], [0], [0], [1], [0, 0, 1, 1], [], []>} : vector<2x256xbf16>, vector<256x416xbf16>, vector<2x416xf32> -> vector<2x416xf32>
    %4 = vector.extract_strided_slice %3 {offsets = [0, 0], sizes = [2, 128], strides = [1, 1]} : vector<2x416xf32> to vector<2x128xf32>
    %5 = vector.extract_strided_slice %3 {offsets = [0, 128], sizes = [2, 288], strides = [1, 1]} : vector<2x416xf32> to vector<2x288xf32>
    %6 = vector.extract_strided_slice %1 {offsets = [0, 0], sizes = [1, 288], strides = [1, 1]} : vector<2x288xf32> to vector<1x288xf32>
    %7 = vector.shape_cast %6 : vector<1x288xf32> to vector<288xf32>
    %8 = vector.shape_cast %7 : vector<288xf32> to vector<1x288xf32>
    %9 = vector.broadcast %8 : vector<1x288xf32> to vector<2x288xf32>
    %10 = arith.addf %5, %9 : vector<2x288xf32>
    %cst_5 = arith.constant 0.000000e+00 : f32
    %11 = vector.broadcast %cst_5 : f32 to vector<2x288xf32>
    %12 = arith.maximumf %10, %11 : vector<2x288xf32>
    %13 = arith.truncf %12 : vector<2x288xf32> to vector<2x288xbf16>
    %c0_6 = arith.constant 0 : index
    %c0_7 = arith.constant 0 : index
    %14 = vector.load %arg3[%c0_6, %c0_7] : memref<288x128xbf16, #tpu.memory_space<vmem>>, vector<288x128xbf16>
    %cst_8 = arith.constant dense<0.000000e+00> : vector<2x128xf32>
    %15 = tpu.matmul %13, %14, %cst_8 {dimension_numbers = #tpu.dot_dimension_numbers<[1], [0], [0], [1], [0, 0, 1, 1], [], []>} : vector<2x288xbf16>, vector<288x128xbf16>, vector<2x128xf32> -> vector<2x128xf32>
    %16 = arith.addf %15, %4 : vector<2x128xf32>
    %17 = vector.extract_strided_slice %1 {offsets = [1, 0], sizes = [1, 128], strides = [1, 1]} : vector<2x288xf32> to vector<1x128xf32>
    %18 = vector.shape_cast %17 : vector<1x128xf32> to vector<128xf32>
    %19 = vector.shape_cast %18 : vector<128xf32> to vector<1x128xf32>
    %20 = vector.broadcast %19 : vector<1x128xf32> to vector<2x128xf32>
    %21 = arith.addf %16, %20 : vector<2x128xf32>
    %cst_9 = arith.constant 0.000000e+00 : f32
    %22 = vector.broadcast %cst_9 : f32 to vector<2x128xf32>
    %23 = arith.maximumf %21, %22 : vector<2x128xf32>
    %c0_10 = arith.constant 0 : index
    %c0_11 = arith.constant 0 : index
    %24 = vector.load %arg5[%c0_10, %c0_11] : memref<2x128xf32, #tpu.memory_space<vmem>>, vector<2x128xf32>
    tpu.vector_store %arg5[%c0_10, %c0_11], %23 {strides = array<i32>} : memref<2x128xf32, #tpu.memory_space<vmem>>, vector<2x128xf32>,
    return
  }
  func.func @transform_0(%arg0: i32) -> (i32, i32) {
    %c0_i32 = arith.constant 0 : i32
    %c0_i32_0 = arith.constant 0 : i32
    return %arg0, %c0_i32 : i32, i32
  }
  func.func @transform_1(%arg0: i32) -> (i32, i32) {
    %c0_i32 = arith.constant 0 : i32
    %c0_i32_0 = arith.constant 0 : i32
    %c0_i32_1 = arith.constant 0 : i32
    return %c0_i32, %c0_i32_0 : i32, i32
  }
  func.func @transform_2(%arg0: i32) -> (i32, i32) {
    %c0_i32 = arith.constant 0 : i32
    %c0_i32_0 = arith.constant 0 : i32
    %c0_i32_1 = arith.constant 0 : i32
    return %c0_i32, %c0_i32_0 : i32, i32
  }
  func.func @transform_3(%arg0: i32) -> (i32, i32) {
    %c0_i32 = arith.constant 0 : i32
    %c0_i32_0 = arith.constant 0 : i32
    %c0_i32_1 = arith.constant 0 : i32
    return %c0_i32, %c0_i32_0 : i32, i32
  }
  func.func @transform_4(%arg0: i32) -> (i32, i32) {
    %c0_i32 = arith.constant 0 : i32
    %c0_i32_0 = arith.constant 0 : i32
    return %arg0, %c0_i32 : i32, i32
  }
}

</mosaic_0001>

<llo_original>
// kernel: tpu_custom_call.1
$region0: #{tpu_custom_call.1}
  #allocation0 [shape = 'u32[]', space=smem, size = 0x4, offset = 0x4, fixed_abs, tag = 'smem constant byte address 0x4 - core index']
  #allocation1 [shape = 'u32[144,128]{1,0:T(1,128)}', space=vmem, size = 0x12000, scoped, tag = 'internal scratch']
  %s0 = inlined_call_operand.vmem [shape: bf16[2,256], index: 0, kind: input, shape index: {}]
  %s1 = inlined_call_operand.vmem [shape: bf16[256,416], index: 1, kind: input, shape index: {}]
  %s2 = inlined_call_operand.vmem [shape: bf16[288,128], index: 2, kind: input, shape index: {}]
  %s3 = inlined_call_operand.vmem [shape: f32[2,288], index: 3, kind: input, shape index: {}]
  %s4 = inlined_call_operand.hbm [shape: f32[2,128], index: 4, kind: output, shape index: {}]
  %s5 = sld [smem:[#allocation0]]
  $region26: #{tpu_custom_call.1} parent=0
    _
  %s7 = ssub.s32 1, %s5
  %s8 = scalar_select 0, %s7, %s5
  $region1: #{tpu_custom_call.1} parent=0
    #allocation2 [shape = 'u8[1024]{0}', space=vmem, size = 0x400, scoped, tag = 'output window, operand 0, single buffered']
    #allocation3 [shape = 's32[1]{0}', space=sflag, size = 0x4, scoped, tag = 'scoped memory for tpu_custom_call.1']
    %9 = vsyncpa [#allocation3], 0
    // Predicated region
    $region2: #{tpu_custom_call.1} parent=1 // pred_check
      _
    $region3: #{tpu_custom_call.1} parent=1 // pred_check_branch
      %11 = sbr.rel (0) target = $region5
    $region4: #{tpu_custom_call.1} parent=1 // pred_region
      _
    $region5: #{tpu_custom_call.1} parent=1 // pred_fallthru
      _
    // Predicated region
    $region6: #{tpu_custom_call.1} parent=1 // pred_check
      _
    $region7: #{tpu_custom_call.1} parent=1 // pred_check_branch
      %13 = sbr.rel (0) target = $region9
    $region8: #{tpu_custom_call.1} parent=1 // pred_region
      _
    $region9: #{tpu_custom_call.1} parent=1 // pred_fallthru
      _
    // Predicated region
    $region10: #{tpu_custom_call.1} parent=1 // pred_check
      _
    $region11: #{tpu_custom_call.1} parent=1 // pred_check_branch
      %15 = sbr.rel (0) target = $region13
    $region12: #{tpu_custom_call.1} parent=1 // pred_region
      _
    $region13: #{tpu_custom_call.1} parent=1 // pred_fallthru
      _
    // Predicated region
    $region14: #{tpu_custom_call.1} parent=1 // pred_check
      _
    $region15: #{tpu_custom_call.1} parent=1 // pred_check_branch
      %17 = sbr.rel (0) target = $region17
    $region16: #{tpu_custom_call.1} parent=1 // pred_region
      _
    $region17: #{tpu_custom_call.1} parent=1 // pred_fallthru
      _
    %v19 = vld [vmem:[%s0] sm:$0x3]
    %v20 = vld [vmem:[%s3] sm:$0x3f]
    %v21 = vld [vmem:[%s1] sm:$0xff]
    %v22 = vld [vmem:[%s1 + $0x8] sm:$0xff]
    %v23 = vld [vmem:[%s1 + $0x10] sm:$0xff]
    %v24 = vld [vmem:[%s1 + $0x18] sm:$0xff]
    %v25 = vld [vmem:[%s1 + $0x20] sm:$0xff]
    %v26 = vld [vmem:[%s1 + $0x28] sm:$0xff]
    %v27 = vld [vmem:[%s1 + $0x30] sm:$0xff]
    %v28 = vld [vmem:[%s1 + $0x38] sm:$0xff]
    %v29 = vld [vmem:[%s1 + $0x40] sm:$0xff]
    %v30 = vld [vmem:[%s1 + $0x48] sm:$0xff]
    %v31 = vld [vmem:[%s1 + $0x50] sm:$0xff]
    %v32 = vld [vmem:[%s1 + $0x58] sm:$0xff]
    %v33 = vld [vmem:[%s1 + $0x60] sm:$0xff]
    %v34 = vld [vmem:[%s1 + $0x68] sm:$0xff]
    %v35 = vld [vmem:[%s1 + $0x70] sm:$0xff]
    %v36 = vld [vmem:[%s1 + $0x78] sm:$0xff]
    %v37 = vld [vmem:[%s1 + $0x80] sm:$0xff]
    %v38 = vld [vmem:[%s1 + $0x88] sm:$0xff]
    %v39 = vld [vmem:[%s1 + $0x90] sm:$0xff]
    %v40 = vld [vmem:[%s1 + $0x98] sm:$0xff]
    %v41 = vld [vmem:[%s1 + $0xa0] sm:$0xff]
    %v42 = vld [vmem:[%s1 + $0xa8] sm:$0xff]
    %v43 = vld [vmem:[%s1 + $0xb0] sm:$0xff]
    %v44 = vld [vmem:[%s1 + $0xb8] sm:$0xff]
    %v45 = vld [vmem:[%s1 + $0xc0] sm:$0xff]
    %v46 = vld [vmem:[%s1 + $0xc8] sm:$0xff]
    %v47 = vld [vmem:[%s1 + $0xd0] sm:$0xff]
    %v48 = vld [vmem:[%s1 + $0xd8] sm:$0xff]
    %v49 = vld [vmem:[%s1 + $0xe0] sm:$0xff]
    %v50 = vld [vmem:[%s1 + $0xe8] sm:$0xff]
    %v51 = vld [vmem:[%s1 + $0xf0] sm:$0xff]
    %v52 = vld [vmem:[%s1 + $0xf8] sm:$0xff]
    %v53 = vld [vmem:[%s1 + $0x100] sm:$0xff]
    %v54 = vld [vmem:[%s1 + $0x108] sm:$0xff]
    %v55 = vld [vmem:[%s1 + $0x110] sm:$0xff]
    %v56 = vld [vmem:[%s1 + $0x118] sm:$0xff]
    %v57 = vld [vmem:[%s1 + $0x120] sm:$0xff]
    %v58 = vld [vmem:[%s1 + $0x128] sm:$0xff]
    %v59 = vld [vmem:[%s1 + $0x130] sm:$0xff]
    %v60 = vld [vmem:[%s1 + $0x138] sm:$0xff]
    %v61 = vld [vmem:[%s1 + $0x140] sm:$0xff]
    %v62 = vld [vmem:[%s1 + $0x148] sm:$0xff]
    %v63 = vld [vmem:[%s1 + $0x150] sm:$0xff]
    %v64 = vld [vmem:[%s1 + $0x158] sm:$0xff]
    %v65 = vld [vmem:[%s1 + $0x160] sm:$0xff]
    %v66 = vld [vmem:[%s1 + $0x168] sm:$0xff]
    %v67 = vld [vmem:[%s1 + $0x170] sm:$0xff]
    %v68 = vld [vmem:[%s1 + $0x178] sm:$0xff]
    %v69 = vld [vmem:[%s1 + $0x180] sm:$0xff]
    %v70 = vld [vmem:[%s1 + $0x188] sm:$0xff]
    %v71 = vld [vmem:[%s1 + $0x190] sm:$0xff]
    %v72 = vld [vmem:[%s1 + $0x198] sm:$0xff]
    %v73 = vld [vmem:[%s1 + $0x1a0] sm:$0xff]
    %v74 = vld [vmem:[%s1 + $0x1a8] sm:$0xff]
    %v75 = vld [vmem:[%s1 + $0x1b0] sm:$0xff]
    %v76 = vld [vmem:[%s1 + $0x1b8] sm:$0xff]
    %v77 = vld [vmem:[%s1 + $0x1c0] sm:$0xff]
    %v78 = vld [vmem:[%s1 + $0x1c8] sm:$0xff]
    %v79 = vld [vmem:[%s1 + $0x1d0] sm:$0xff]
    %v80 = vld [vmem:[%s1 + $0x1d8] sm:$0xff]
    %v81 = vld [vmem:[%s1 + $0x1e0] sm:$0xff]
    %v82 = vld [vmem:[%s1 + $0x1e8] sm:$0xff]
    %v83 = vld [vmem:[%s1 + $0x1f0] sm:$0xff]
    %v84 = vld [vmem:[%s1 + $0x1f8] sm:$0xff]
    %v87 = vunpack.c.l.s4 1966171168
    %v88 = vunpack.c.0.s8 %v87
    %v89 = vlaneseq
    %v90 = vshrl.u32 %v89, 7
    %v91 = vsub.s32 %v88, %v90
    %v92 = vrot.slane %v19, %v91
    %v93 = vcombine.high %v92, %v92
    %v95 = vunpack.c.l.s4 1966171168
    %v96 = vunpack.c.0.s8 %v95
    %v97 = vlaneseq
    %v98 = vshrl.u32 %v97, 7
    %v99 = vsub.s32 %v96, %v98
    %v100 = vrot.slane %v92, %v99
    %v102 = vunpack.c.l.s4 1966171168
    %v103 = vunpack.c.0.s8 %v102
    %v104 = vlaneseq
    %v105 = vshrl.u32 %v104, 7
    %v106 = vsub.s32 %v103, %v105
    %v107 = vrot.slane %v93, %v106
    %v174 = vunpack.c.l.b16 %v21
    %v175 = vunpack.c.h.b16 %v21
    %v176 = vunpack.c.l.b16 %v22
    %v177 = vunpack.c.h.b16 %v22
    %v178 = vunpack.c.l.b16 %v23
    %v179 = vunpack.c.h.b16 %v23
    %v180 = vunpack.c.l.b16 %v24
    %v181 = vunpack.c.h.b16 %v24
    %v182 = vunpack.c.l.b16 %v25
    %v183 = vunpack.c.h.b16 %v25
    %v184 = vunpack.c.l.b16 %v26
    %v185 = vunpack.c.h.b16 %v26
    %v186 = vunpack.c.l.b16 %v27
    %v187 = vunpack.c.h.b16 %v27
    %v188 = vunpack.c.l.b16 %v28
    %v189 = vunpack.c.h.b16 %v28
    %v190 = vunpack.c.l.b16 %v29
    %v191 = vunpack.c.h.b16 %v29
    %v192 = vunpack.c.l.b16 %v30
    %v193 = vunpack.c.h.b16 %v30
    %v194 = vunpack.c.l.b16 %v31
    %v195 = vunpack.c.h.b16 %v31
    %v196 = vunpack.c.l.b16 %v32
    %v197 = vunpack.c.h.b16 %v32
    %v198 = vunpack.c.l.b16 %v33
    %v199 = vunpack.c.h.b16 %v33
    %v200 = vunpack.c.l.b16 %v34
    %v201 = vunpack.c.h.b16 %v34
    %v202 = vunpack.c.l.b16 %v35
    %v203 = vunpack.c.h.b16 %v35
    %v204 = vunpack.c.l.b16 %v36
    %v205 = vunpack.c.h.b16 %v36
    %v206 = vunpack.c.l.b16 %v37
    %v207 = vunpack.c.h.b16 %v37
    %v208 = vunpack.c.l.b16 %v38
    %v209 = vunpack.c.h.b16 %v38
    %v210 = vunpack.c.l.b16 %v39
    %v211 = vunpack.c.h.b16 %v39
    %v212 = vunpack.c.l.b16 %v40
    %v213 = vunpack.c.h.b16 %v40
    %v214 = vunpack.c.l.b16 %v41
    %v215 = vunpack.c.h.b16 %v41
    %v216 = vunpack.c.l.b16 %v42
    %v217 = vunpack.c.h.b16 %v42
    %v218 = vunpack.c.l.b16 %v43
    %v219 = vunpack.c.h.b16 %v43
    %v220 = vunpack.c.l.b16 %v44
    %v221 = vunpack.c.h.b16 %v44
    %v222 = vunpack.c.l.b16 %v45
    %v223 = vunpack.c.h.b16 %v45
    %v224 = vunpack.c.l.b16 %v46
    %v225 = vunpack.c.h.b16 %v46
    %v226 = vunpack.c.l.b16 %v47
    %v227 = vunpack.c.h.b16 %v47
    %v228 = vunpack.c.l.b16 %v48
    %v229 = vunpack.c.h.b16 %v48
    %v230 = vunpack.c.l.b16 %v49
    %v231 = vunpack.c.h.b16 %v49
    %v232 = vunpack.c.l.b16 %v50
    %v233 = vunpack.c.h.b16 %v50
    %v234 = vunpack.c.l.b16 %v51
    %v235 = vunpack.c.h.b16 %v51
    %v236 = vunpack.c.l.b16 %v52
    %v237 = vunpack.c.h.b16 %v52
    %v238 = vunpack.c.l.b16 %v53
    %v239 = vunpack.c.h.b16 %v53
    %v240 = vunpack.c.l.b16 %v54
    %v241 = vunpack.c.h.b16 %v54
    %v242 = vunpack.c.l.b16 %v55
    %v243 = vunpack.c.h.b16 %v55
    %v244 = vunpack.c.l.b16 %v56
    %v245 = vunpack.c.h.b16 %v56
    %v246 = vunpack.c.l.b16 %v57
    %v247 = vunpack.c.h.b16 %v57
    %v248 = vunpack.c.l.b16 %v58
    %v249 = vunpack.c.h.b16 %v58
    %v250 = vunpack.c.l.b16 %v59
    %v251 = vunpack.c.h.b16 %v59
    %v252 = vunpack.c.l.b16 %v60
    %v253 = vunpack.c.h.b16 %v60
    %v254 = vunpack.c.l.b16 %v61
    %v255 = vunpack.c.h.b16 %v61
    %v256 = vunpack.c.l.b16 %v62
    %v257 = vunpack.c.h.b16 %v62
    %v258 = vunpack.c.l.b16 %v63
    %v259 = vunpack.c.h.b16 %v63
    %v260 = vunpack.c.l.b16 %v64
    %v261 = vunpack.c.h.b16 %v64
    %v262 = vunpack.c.l.b16 %v65
    %v263 = vunpack.c.h.b16 %v65
    %v264 = vunpack.c.l.b16 %v66
    %v265 = vunpack.c.h.b16 %v66
    %v266 = vunpack.c.l.b16 %v67
    %v267 = vunpack.c.h.b16 %v67
    %v268 = vunpack.c.l.b16 %v68
    %v269 = vunpack.c.h.b16 %v68
    %v270 = vunpack.c.l.b16 %v69
    %v271 = vunpack.c.h.b16 %v69
    %v272 = vunpack.c.l.b16 %v70
    %v273 = vunpack.c.h.b16 %v70
    %v274 = vunpack.c.l.b16 %v71
    %v275 = vunpack.c.h.b16 %v71
    %v276 = vunpack.c.l.b16 %v72
    %v277 = vunpack.c.h.b16 %v72
    %v278 = vunpack.c.l.b16 %v73
    %v279 = vunpack.c.h.b16 %v73
    %v280 = vunpack.c.l.b16 %v74
    %v281 = vunpack.c.h.b16 %v74
    %v282 = vunpack.c.l.b16 %v75
    %v283 = vunpack.c.h.b16 %v75
    %v284 = vunpack.c.l.b16 %v76
    %v285 = vunpack.c.h.b16 %v76
    %v286 = vunpack.c.l.b16 %v77
    %v287 = vunpack.c.h.b16 %v77
    %v288 = vunpack.c.l.b16 %v78
    %v289 = vunpack.c.h.b16 %v78
    %v290 = vunpack.c.l.b16 %v79
    %v291 = vunpack.c.h.b16 %v79
    %v292 = vunpack.c.l.b16 %v80
    %v293 = vunpack.c.h.b16 %v80
    %v294 = vunpack.c.l.b16 %v81
    %v295 = vunpack.c.h.b16 %v81
    %v296 = vunpack.c.l.b16 %v82
    %v297 = vunpack.c.h.b16 %v82
    %v298 = vunpack.c.l.b16 %v83
    %v299 = vunpack.c.h.b16 %v83
    %v300 = vunpack.c.l.b16 %v84
    %v301 = vunpack.c.h.b16 %v84
    %v302 = vpack.c.b16 %v178, %v174
    %v303 = vpack.c.b16 %v179, %v175
    %v304 = vpack.c.b16 %v180, %v176
    %v305 = vpack.c.b16 %v181, %v177
    %v306 = vpack.c.b16 %v186, %v182
    %v307 = vpack.c.b16 %v187, %v183
    %v308 = vpack.c.b16 %v188, %v184
    %v309 = vpack.c.b16 %v189, %v185
    %v310 = vpack.c.b16 %v194, %v190
    %v311 = vpack.c.b16 %v195, %v191
    %v312 = vpack.c.b16 %v196, %v192
    %v313 = vpack.c.b16 %v197, %v193
    %v314 = vpack.c.b16 %v202, %v198
    %v315 = vpack.c.b16 %v203, %v199
    %v316 = vpack.c.b16 %v204, %v200
    %v317 = vpack.c.b16 %v205, %v201
    %v318 = vpack.c.b16 %v210, %v206
    %v319 = vpack.c.b16 %v211, %v207
    %v320 = vpack.c.b16 %v212, %v208
    %v321 = vpack.c.b16 %v213, %v209
    %v322 = vpack.c.b16 %v218, %v214
    %v323 = vpack.c.b16 %v219, %v215
    %v324 = vpack.c.b16 %v220, %v216
    %v325 = vpack.c.b16 %v221, %v217
    %v326 = vpack.c.b16 %v226, %v222
    %v327 = vpack.c.b16 %v227, %v223
    %v328 = vpack.c.b16 %v228, %v224
    %v329 = vpack.c.b16 %v229, %v225
    %v330 = vpack.c.b16 %v234, %v230
    %v331 = vpack.c.b16 %v235, %v231
    %v332 = vpack.c.b16 %v236, %v232
    %v333 = vpack.c.b16 %v237, %v233
    %v334 = vpack.c.b16 %v242, %v238
    %v335 = vpack.c.b16 %v243, %v239
    %v336 = vpack.c.b16 %v244, %v240
    %v337 = vpack.c.b16 %v245, %v241
    %v338 = vpack.c.b16 %v250, %v246
    %v339 = vpack.c.b16 %v251, %v247
    %v340 = vpack.c.b16 %v252, %v248
    %v341 = vpack.c.b16 %v253, %v249
    %v342 = vpack.c.b16 %v258, %v254
    %v343 = vpack.c.b16 %v259, %v255
    %v344 = vpack.c.b16 %v260, %v256
    %v345 = vpack.c.b16 %v261, %v257
    %v346 = vpack.c.b16 %v266, %v262
    %v347 = vpack.c.b16 %v267, %v263
    %v348 = vpack.c.b16 %v268, %v264
    %v349 = vpack.c.b16 %v269, %v265
    %v350 = vpack.c.b16 %v274, %v270
    %v351 = vpack.c.b16 %v275, %v271
    %v352 = vpack.c.b16 %v276, %v272
    %v353 = vpack.c.b16 %v277, %v273
    %v354 = vpack.c.b16 %v282, %v278
    %v355 = vpack.c.b16 %v283, %v279
    %v356 = vpack.c.b16 %v284, %v280
    %v357 = vpack.c.b16 %v285, %v281
    %v358 = vpack.c.b16 %v290, %v286
    %v359 = vpack.c.b16 %v291, %v287
    %v360 = vpack.c.b16 %v292, %v288
    %v361 = vpack.c.b16 %v293, %v289
    %v362 = vpack.c.b16 %v298, %v294
    %v363 = vpack.c.b16 %v299, %v295
    %v364 = vpack.c.b16 %v300, %v296
    %v365 = vpack.c.b16 %v301, %v297
    %430 = vmatprep.subr.bf16.mxu0 %v303
    %431 = vmatpush1.bf16.msra.mxu0 %v302
    %432 = vmatprep.subr.bf16.mxu0 %v307
    %433 = vmatpush1.bf16.msra.mxu0 %v306
    %434 = vmatprep.subr.bf16.mxu0 %v311
    %435 = vmatpush1.bf16.msra.mxu0 %v310
    %436 = vmatprep.subr.bf16.mxu0 %v315
    %437 = vmatpush1.bf16.msra.mxu0 %v314
    %438 = vmatprep.subr.bf16.mxu0 %v319
    %439 = vmatpush1.bf16.msra.mxu0 %v318
    %440 = vmatprep.subr.bf16.mxu0 %v323
    %441 = vmatpush1.bf16.msra.mxu0 %v322
    %442 = vmatprep.subr.bf16.mxu0 %v327
    %443 = vmatpush1.bf16.msra.mxu0 %v326
    %444 = vmatprep.subr.bf16.mxu0 %v331
    %445 = vmatpush1.bf16.msra.mxu0 %v330
    %446 = vmatprep.subr.bf16.mxu0 %v335
    %447 = vmatpush1.bf16.msra.mxu0 %v334
    %448 = vmatprep.subr.bf16.mxu0 %v339
    %449 = vmatpush1.bf16.msra.mxu0 %v338
    %450 = vmatprep.subr.bf16.mxu0 %v343
    %451 = vmatpush1.bf16.msra.mxu0 %v342
    %452 = vmatprep.subr.bf16.mxu0 %v347
    %453 = vmatpush1.bf16.msra.mxu0 %v346
    %454 = vmatprep.subr.bf16.mxu0 %v351
    %455 = vmatpush1.bf16.msra.mxu0 %v350
    %456 = vmatprep.subr.bf16.mxu0 %v355
    %457 = vmatpush1.bf16.msra.mxu0 %v354
    %458 = vmatprep.subr.bf16.mxu0 %v359
    %459 = vmatpush1.bf16.msra.mxu0 %v358
    %460 = vmatprep.subr.bf16.mxu0 %v363
    %461 = vmatpush1.bf16.msra.mxu0 %v362
    %462 = vmatprep.mubr.bf16.mxu0 %v107
    %463 = vmatmul.mubr.bf16.gmra.mrb[0].mxu0 %v100
    %v464 = vpop.f32.mrb[0].mxu0
    %v465 = vadd.f32 0.0, %v464
    %v466 = vpop.f32.mrb[0].mxu0
    %v467 = vadd.f32 0.0, %v466
    %v468 = vpop.f32.mrb[0].mxu0
    %v469 = vpop.f32.mrb[0].mxu0
    %470 = vdwg.mxu0
    %471 = vmatprep.subr.bf16.mxu0 %v305
    %472 = vmatpush1.bf16.msra.mxu0 %v304
    %473 = vmatprep.subr.bf16.mxu0 %v309
    %474 = vmatpush1.bf16.msra.mxu0 %v308
    %475 = vmatprep.subr.bf16.mxu0 %v313
    %476 = vmatpush1.bf16.msra.mxu0 %v312
    %477 = vmatprep.subr.bf16.mxu0 %v317
    %478 = vmatpush1.bf16.msra.mxu0 %v316
    %479 = vmatprep.subr.bf16.mxu0 %v321
    %480 = vmatpush1.bf16.msra.mxu0 %v320
    %481 = vmatprep.subr.bf16.mxu0 %v325
    %482 = vmatpush1.bf16.msra.mxu0 %v324
    %483 = vmatprep.subr.bf16.mxu0 %v329
    %484 = vmatpush1.bf16.msra.mxu0 %v328
    %485 = vmatprep.subr.bf16.mxu0 %v333
    %486 = vmatpush1.bf16.msra.mxu0 %v332
    %487 = vmatprep.subr.bf16.mxu0 %v337
    %488 = vmatpush1.bf16.msra.mxu0 %v336
    %489 = vmatprep.subr.bf16.mxu0 %v341
    %490 = vmatpush1.bf16.msra.mxu0 %v340
    %491 = vmatprep.subr.bf16.mxu0 %v345
    %492 = vmatpush1.bf16.msra.mxu0 %v344
    %493 = vmatprep.subr.bf16.mxu0 %v349
    %494 = vmatpush1.bf16.msra.mxu0 %v348
    %495 = vmatprep.subr.bf16.mxu0 %v353
    %496 = vmatpush1.bf16.msra.mxu0 %v352
    %497 = vmatprep.subr.bf16.mxu0 %v357
    %498 = vmatpush1.bf16.msra.mxu0 %v356
    %499 = vmatprep.subr.bf16.mxu0 %v361
    %500 = vmatpush1.bf16.msra.mxu0 %v360
    %501 = vmatprep.subr.bf16.mxu0 %v365
    %502 = vmatpush1.bf16.msra.mxu0 %v364
    %503 = vmatprep.mubr.bf16.mxu0 %v107
    %504 = vmatmul.mubr.bf16.gmra.mrb[0].mxu0 %v100
    %v505 = vpop.f32.mrb[0].mxu0
    %v506 = vadd.f32 0.0, %v505
    %v507 = vpop.f32.mrb[0].mxu0
    %v508 = vadd.f32 0.0, %v507
    %v509 = vpop.f32.mrb[0].mxu0
    %v510 = vpop.f32.mrb[0].mxu0
    %511 = vdwg.mxu0
    %v513 = vlaneseq
    %v514 = vshrl.u32 %v513, 7
    %v515 = vsub.s32 0, %v514
    %v516 = vrot.slane %v20, %v515
    %v517 = vlaneseq
    %v518 = vshrl.u32 %v517, 7
    %v519 = vsub.s32 2, %v518
    %v520 = vrot.slane %v20, %v519
    %v521 = vlaneseq
    %v522 = vshrl.u32 %v521, 7
    %v523 = vsub.s32 4, %v522
    %v524 = vrot.slane %v20, %v523
    %v528 = vlaneseq
    %v529 = vshrl.u32 %v528, 7
    %v530 = vsub.s32 0, %v529
    %v531 = vrot.slane %v516, %v530
    %v532 = vlaneseq
    %v533 = vshrl.u32 %v532, 7
    %v534 = vsub.s32 0, %v533
    %v535 = vrot.slane %v520, %v534
    %v536 = vlaneseq
    %v537 = vshrl.u32 %v536, 7
    %v538 = vsub.s32 0, %v537
    %v539 = vrot.slane %v524, %v538
    %v540 = vadd.f32 %v467, %v531
    %v541 = vadd.f32 %v506, %v535
    %v542 = vadd.f32 %v508, %v539
    %v543 = vmax.f32 %v540, 0.0
    %v544 = vmax.f32 %v541, 0.0
    %v545 = vmax.f32 %v542, 0.0
    %v546 = vpack.c.bf16 %v543, %v543
    %v547 = vpack.c.bf16 %v544, %v544
    %v548 = vpack.c.bf16 %v545, %v545
    %v549 = vld [vmem:[%s2] sm:$0xf]
    %v550 = vld [vmem:[%s2 + $0x4] sm:$0xf]
    %v551 = vld [vmem:[%s2 + $0x8] sm:$0xf]
    %v552 = vld [vmem:[%s2 + $0xc] sm:$0xf]
    %v553 = vld [vmem:[%s2 + $0x10] sm:$0xf]
    %v554 = vld [vmem:[%s2 + $0x14] sm:$0xf]
    %v555 = vld [vmem:[%s2 + $0x18] sm:$0xf]
    %v556 = vld [vmem:[%s2 + $0x1c] sm:$0xf]
    %v557 = vld [vmem:[%s2 + $0x20] sm:$0xf]
    %v558 = vld [vmem:[%s2 + $0x24] sm:$0xf]
    %v559 = vld [vmem:[%s2 + $0x28] sm:$0xf]
    %v560 = vld [vmem:[%s2 + $0x2c] sm:$0xf]
    %v561 = vld [vmem:[%s2 + $0x30] sm:$0xf]
    %v562 = vld [vmem:[%s2 + $0x34] sm:$0xf]
    %v563 = vld [vmem:[%s2 + $0x38] sm:$0xf]
    %v564 = vld [vmem:[%s2 + $0x3c] sm:$0xf]
    %v565 = vld [vmem:[%s2 + $0x40] sm:$0xf]
    %v566 = vld [vmem:[%s2 + $0x44] sm:$0xf]
    %v567 = vld [vmem:[%s2 + $0x48] sm:$0xf]
    %v568 = vld [vmem:[%s2 + $0x4c] sm:$0xf]
    %v569 = vld [vmem:[%s2 + $0x50] sm:$0xf]
    %v570 = vld [vmem:[%s2 + $0x54] sm:$0xf]
    %v571 = vld [vmem:[%s2 + $0x58] sm:$0xf]
    %v572 = vld [vmem:[%s2 + $0x5c] sm:$0xf]
    %v573 = vld [vmem:[%s2 + $0x60] sm:$0xf]
    %v574 = vld [vmem:[%s2 + $0x64] sm:$0xf]
    %v575 = vld [vmem:[%s2 + $0x68] sm:$0xf]
    %v576 = vld [vmem:[%s2 + $0x6c] sm:$0xf]
    %v577 = vld [vmem:[%s2 + $0x70] sm:$0xf]
    %v578 = vld [vmem:[%s2 + $0x74] sm:$0xf]
    %v579 = vld [vmem:[%s2 + $0x78] sm:$0xf]
    %v580 = vld [vmem:[%s2 + $0x7c] sm:$0xf]
    %v581 = vld [vmem:[%s2 + $0x80] sm:$0xf]
    %v582 = vld [vmem:[%s2 + $0x84] sm:$0xf]
    %v583 = vld [vmem:[%s2 + $0x88] sm:$0xf]
    %v584 = vld [vmem:[%s2 + $0x8c] sm:$0xf]
    %v621 = vunpack.c.l.b16 %v549
    %v622 = vunpack.c.l.b16 %v550
    %v623 = vunpack.c.l.b16 %v551
    %v624 = vunpack.c.l.b16 %v552
    %v625 = vunpack.c.l.b16 %v553
    %v626 = vunpack.c.l.b16 %v554
    %v627 = vunpack.c.l.b16 %v555
    %v628 = vunpack.c.l.b16 %v556
    %v629 = vunpack.c.l.b16 %v557
    %v630 = vunpack.c.l.b16 %v558
    %v631 = vunpack.c.l.b16 %v559
    %v632 = vunpack.c.l.b16 %v560
    %v633 = vunpack.c.l.b16 %v561
    %v634 = vunpack.c.l.b16 %v562
    %v635 = vunpack.c.l.b16 %v563
    %v636 = vunpack.c.l.b16 %v564
    %v637 = vunpack.c.l.b16 %v565
    %v638 = vunpack.c.l.b16 %v566
    %v639 = vunpack.c.l.b16 %v567
    %v640 = vunpack.c.l.b16 %v568
    %v641 = vunpack.c.l.b16 %v569
    %v642 = vunpack.c.l.b16 %v570
    %v643 = vunpack.c.l.b16 %v571
    %v644 = vunpack.c.l.b16 %v572
    %v645 = vunpack.c.l.b16 %v573
    %v646 = vunpack.c.l.b16 %v574
    %v647 = vunpack.c.l.b16 %v575
    %v648 = vunpack.c.l.b16 %v576
    %v649 = vunpack.c.l.b16 %v577
    %v650 = vunpack.c.l.b16 %v578
    %v651 = vunpack.c.l.b16 %v579
    %v652 = vunpack.c.l.b16 %v580
    %v653 = vunpack.c.l.b16 %v581
    %v654 = vunpack.c.l.b16 %v582
    %v655 = vunpack.c.l.b16 %v583
    %v656 = vunpack.c.l.b16 %v584
    %v657 = vpack.c.b16 %v622, %v621
    %v658 = vpack.c.b16 %v624, %v623
    %v659 = vpack.c.b16 %v626, %v625
    %v660 = vpack.c.b16 %v628, %v627
    %v661 = vpack.c.b16 %v630, %v629
    %v662 = vpack.c.b16 %v632, %v631
    %v663 = vpack.c.b16 %v634, %v633
    %v664 = vpack.c.b16 %v636, %v635
    %v665 = vpack.c.b16 %v638, %v637
    %v666 = vpack.c.b16 %v640, %v639
    %v667 = vpack.c.b16 %v642, %v641
    %v668 = vpack.c.b16 %v644, %v643
    %v669 = vpack.c.b16 %v646, %v645
    %v670 = vpack.c.b16 %v648, %v647
    %v671 = vpack.c.b16 %v650, %v649
    %v672 = vpack.c.b16 %v652, %v651
    %v673 = vpack.c.b16 %v654, %v653
    %v674 = vpack.c.b16 %v656, %v655
    %vm693 = vcmask 261120
    %v695 = vsel %vm693, %v548, 0
    %697 = vmatprep.subr.bf16.mxu0 0
    %698 = vmatpush1.bf16.msra.mxu0 %v657
    %699 = vmatprep.subr.bf16.mxu0 0
    %700 = vmatpush1.bf16.msra.mxu0 %v658
    %701 = vmatprep.subr.bf16.mxu0 0
    %702 = vmatpush1.bf16.msra.mxu0 %v659
    %703 = vmatprep.subr.bf16.mxu0 0
    %704 = vmatpush1.bf16.msra.mxu0 %v660
    %705 = vmatprep.subr.bf16.mxu0 0
    %706 = vmatpush1.bf16.msra.mxu0 %v661
    %707 = vmatprep.subr.bf16.mxu0 0
    %708 = vmatpush1.bf16.msra.mxu0 %v662
    %709 = vmatprep.subr.bf16.mxu0 0
    %710 = vmatpush1.bf16.msra.mxu0 %v663
    %711 = vmatprep.subr.bf16.mxu0 0
    %712 = vmatpush1.bf16.msra.mxu0 %v664
    %713 = vmatprep.subr.bf16.mxu0 0
    %714 = vmatpush1.bf16.msra.mxu0 %v665
    %715 = vmatprep.subr.bf16.mxu0 0
    %716 = vmatpush1.bf16.msra.mxu0 %v666
    %717 = vmatprep.subr.bf16.mxu0 0
    %718 = vmatpush1.bf16.msra.mxu0 %v667
    %719 = vmatprep.subr.bf16.mxu0 0
    %720 = vmatpush1.bf16.msra.mxu0 %v668
    %721 = vmatprep.subr.bf16.mxu0 0
    %722 = vmatpush1.bf16.msra.mxu0 %v669
    %723 = vmatprep.subr.bf16.mxu0 0
    %724 = vmatpush1.bf16.msra.mxu0 %v670
    %725 = vmatprep.subr.bf16.mxu0 0
    %726 = vmatpush1.bf16.msra.mxu0 %v671
    %727 = vmatprep.subr.bf16.mxu0 0
    %728 = vmatpush1.bf16.msra.mxu0 %v672
    %729 = vmatprep.mubr.bf16.mxu0 %v547
    %730 = vmatmul.mubr.bf16.gmra.mrb[0].mxu0 %v546
    %v731 = vpop.f32.mrb[0].mxu0
    %v732 = vadd.f32 %v465, %v731
    %v733 = vpop.f32.mrb[0].mxu0
    %v734 = vpop.f32.mrb[0].mxu0
    %v735 = vpop.f32.mrb[0].mxu0
    %736 = vdwg.mxu0
    %737 = vmatprep.subr.bf16.mxu0 0
    %738 = vmatpush1.bf16.msra.mxu0 %v673
    %739 = vmatprep.subr.bf16.mxu0 0
    %740 = vmatpush1.bf16.msra.mxu0 %v674
    %741 = vmatprep.subr.bf16.mxu0 0
    %742 = vmatpush1.bf16.msra.mxu0 0
    %743 = vmatprep.subr.bf16.mxu0 0
    %744 = vmatpush1.bf16.msra.mxu0 0
    %745 = vmatprep.subr.bf16.mxu0 0
    %746 = vmatpush1.bf16.msra.mxu0 0
    %747 = vmatprep.subr.bf16.mxu0 0
    %748 = vmatpush1.bf16.msra.mxu0 0
    %749 = vmatprep.subr.bf16.mxu0 0
    %750 = vmatpush1.bf16.msra.mxu0 0
    %751 = vmatprep.subr.bf16.mxu0 0
    %752 = vmatpush1.bf16.msra.mxu0 0
    %753 = vmatprep.subr.bf16.mxu0 0
    %754 = vmatpush1.bf16.msra.mxu0 0
    %755 = vmatprep.subr.bf16.mxu0 0
    %756 = vmatpush1.bf16.msra.mxu0 0
    %757 = vmatprep.subr.bf16.mxu0 0
    %758 = vmatpush1.bf16.msra.mxu0 0
    %759 = vmatprep.subr.bf16.mxu0 0
    %760 = vmatpush1.bf16.msra.mxu0 0
    %761 = vmatprep.subr.bf16.mxu0 0
    %762 = vmatpush1.bf16.msra.mxu0 0
    %763 = vmatprep.subr.bf16.mxu0 0
    %764 = vmatpush1.bf16.msra.mxu0 0
    %765 = vmatprep.subr.bf16.mxu0 0
    %766 = vmatpush1.bf16.msra.mxu0 0
    %767 = vmatprep.subr.bf16.mxu0 0
    %768 = vmatpush1.bf16.msra.mxu0 0
    %769 = vmatprep.mubr.bf16.mxu0 0
    %770 = vmatmul.mubr.bf16.gmra.mrb[0].mxu0 %v695
    %v771 = vpop.f32.mrb[0].mxu0
    %v772 = vadd.f32 %v732, %v771
    %v773 = vpop.f32.mrb[0].mxu0
    %v774 = vpop.f32.mrb[0].mxu0
    %v775 = vpop.f32.mrb[0].mxu0
    %776 = vdwg.mxu0
    %v777 = vlaneseq
    %v778 = vshrl.u32 %v777, 7
    %v779 = vsub.s32 1, %v778
    %v780 = vrot.slane %v20, %v779
    %v781 = vadd.f32 %v772, %v780
    %v782 = vmax.f32 %v781, 0.0
    %783 = vst [vmem:[#allocation2] sm:$0x3] %v782
    // Predicated region
    $region18: #{tpu_custom_call.1} parent=1 // pred_check
      _
    $region19: #{tpu_custom_call.1} parent=1 // pred_check_branch
      %785 = sbr.rel (0) target = $region21
    $region20: #{tpu_custom_call.1} parent=1 // pred_region
      %s787 = ssub.s32 32, 32
      %788 = vsyncadd [#allocation3], %s787
      %s790 = sshll.u32 [#allocation2], 4
      %s791 = int_to_ptr.vmem [resolvable:$true] %s790
      %793 = dma.vmem_to_hbm [thread:$0]  %s791, 32, %s4, [#allocation3]
    $region21: #{tpu_custom_call.1} parent=1 // pred_fallthru
      _
    // Predicated region
    $region22: #{tpu_custom_call.1} parent=1 // pred_check
      _
    $region23: #{tpu_custom_call.1} parent=1 // pred_check_branch
      %795 = sbr.rel (0) target = $region25
    $region24: #{tpu_custom_call.1} parent=1 // pred_region
      %796 = dma.done [#allocation3], 32
    $region25: #{tpu_custom_call.1} parent=1 // pred_fallthru
      _
    %797 = vsyncpa [#allocation3], 1

</llo_original>
